<compile_context>
chip_gen: v5e
topology: v5e:2x2
jax: 0.10.0
libtpu: 0.0.40
codegen_flags: <defaults>
</compile_context>

<pallas_src>
import functools
import math

import jax
import jax.numpy as jnp
from jax.experimental import pallas as pl
from jax.experimental.pallas import tpu as pltpu

_PAD = 128   # lane-aligned start of the tile interior inside the halo scratch
_HALO = 2    # conv5 / maxpool(3) need 2 extra lanes on each side


def _inception_kernel(*refs, multi_tile):
    if multi_tile:
        (x_ref, x_hbm_ref, wc_ref, bc_ref, w4_ref, b4_ref,
         o_ref, xh_ref, sem_ref) = refs
    else:
        (x_ref, wc_ref, bc_ref, w4_ref, b4_ref, o_ref, xh_ref) = refs
        x_hbm_ref = None
        sem_ref = None

    b = pl.program_id(0)
    j = pl.program_id(1)
    nL = pl.num_programs(1)
    C_in = x_ref.shape[1]
    TL = x_ref.shape[2]

    base = _PAD - _HALO          # scratch lane holding input offset (l - 2)

    if multi_tile:
        # Tiny (C_in x 2) halo DMAs from HBM, only for interior tile edges.
        def left_copy():
            return pltpu.make_async_copy(
                x_hbm_ref.at[b, :, pl.ds(j * TL - _HALO, _HALO)],
                xh_ref.at[:, pl.ds(_PAD - _HALO, _HALO)],
                sem_ref.at[0])

        def right_copy():
            return pltpu.make_async_copy(
                x_hbm_ref.at[b, :, pl.ds((j + 1) * TL, _HALO)],
                xh_ref.at[:, pl.ds(_PAD + TL, _HALO)],
                sem_ref.at[1])

        @pl.when(j > 0)
        def _():
            left_copy().start()

        @pl.when(j < nL - 1)
        def _():
            right_copy().start()

    # Global sequence boundaries: zero halo (Conv1d zero padding).  Written
    # only on the first / last L-tile — 2 lanes each, essentially free.
    @pl.when(j == 0)
    def _():
        xh_ref[:, _PAD - _HALO:_PAD] = jnp.zeros((C_in, _HALO), jnp.float32)

    @pl.when(j == nL - 1)
    def _():
        xh_ref[:, _PAD + TL:_PAD + TL + _HALO] = jnp.zeros((C_in, _HALO),
                                                           jnp.float32)

    # Lane-aligned copy of the tile interior (_PAD % 128 == 0: no rotation).
    xh_ref[:, _PAD:_PAD + TL] = x_ref[0]

    if multi_tile:
        @pl.when(j > 0)
        def _():
            left_copy().wait()

        @pl.when(j < nL - 1)
        def _():
            right_copy().wait()

    # ---- branches 1-3: shared-tap conv (5 fused matmuls, one bias add) ----
    # tap k corresponds to input offset (k - 2).
    acc = jnp.dot(wc_ref[0], xh_ref[:, base:base + TL],
                  preferred_element_type=jnp.float32)
    for k in range(1, 5):
        acc = acc + jnp.dot(wc_ref[k], xh_ref[:, base + k:base + k + TL],
                            preferred_element_type=jnp.float32)
    acc = acc + bc_ref[...]                               # (3*bc, TL)

    # ---- branch 4: maxpool(k=3, s=1, p=1) -> 1x1 conv ----
    xm1 = xh_ref[:, base + 1:base + 1 + TL]               # x[l-1]
    x0 = xh_ref[:, base + 2:base + 2 + TL]                # x[l]
    xp1 = xh_ref[:, base + 3:base + 3 + TL]               # x[l+1]
    w01 = jnp.maximum(xm1, x0)
    w12 = jnp.maximum(x0, xp1)
    pooled = jnp.maximum(w01, xp1)
    # PyTorch MaxPool1d pads with -inf: at the global sequence edges the
    # zero-padded neighbour must be dropped.  Patch only the affected lane,
    # only on the global first / last L-tile.
    lane = jax.lax.broadcasted_iota(jnp.int32, (C_in, TL), 1)
    pooled = jnp.where(jnp.logical_and(j == 0, lane == 0), w12, pooled)
    pooled = jnp.where(jnp.logical_and(j == nL - 1, lane == TL - 1),
                       w01, pooled)
    y4 = jnp.dot(w4_ref[...], pooled,
                 preferred_element_type=jnp.float32) + b4_ref[...]   # (bc, TL)

    # ---- fused ReLU + one full-block (lane-dense) store ----
    y = jnp.concatenate([acc, y4], axis=0)                # (4*bc, TL)
    o_ref[0] = jnp.maximum(y, 0.0).astype(o_ref.dtype)


def _pick_l_tile(L, max_tile):
    """Largest divisor of L that is <= max_tile (prefer multiples of 128)."""
    if L <= max_tile:
        return L
    best = None
    for t in range(max_tile, 127, -1):          # multi-tile only for TILE>=128
        if L % t == 0:
            if t % 128 == 0:
                return t
            if best is None:
                best = t
    return best if best is not None else L


def _fuse_weights(params):
    """Fuse branch 1-3 weights into one shared-tap (5, 3*bc, C_in) weight."""
    w1, b1, w2, b2, w3, b3, w4, b4 = params      # PyTorch Conv1d layouts
    bc, c_in = w1.shape[0], w1.shape[1]
    wc = jnp.zeros((5, 3 * bc, c_in), jnp.float32)
    wc = wc.at[2, 0:bc, :].set(w1[:, :, 0])                      # k=1: centre
    wc = wc.at[1:4, bc:2 * bc, :].set(jnp.moveaxis(w2, 2, 0))    # k=3: -1..+1
    wc = wc.at[:, 2 * bc:, :].set(jnp.moveaxis(w3, 2, 0))        # k=5: -2..+2
    bcat = jnp.concatenate([b1, b2, b3])[:, None].astype(jnp.float32)
    w4_2d = w4[:, :, 0].astype(jnp.float32)
    b4col = b4[:, None].astype(jnp.float32)
    return wc, bcat, w4_2d, b4col


def inception1d_pallas(x, params, *, max_tile_l=1024):
    """Inception1D forward.  x: (B, C_in, L) float32 NCL -> (B, out_ch, L)."""
    B, C_in, L = x.shape
    bc = params[0].shape[0]
    out_ch = 4 * bc
    # TODO(synk): L == 1 maxpool edge case (needs a true -inf halo) is asserted out.
    assert L >= 2

    wc, bcat, w4_2d, b4col = _fuse_weights(params)
    x = x.astype(jnp.float32)

    TILE_L = _pick_l_tile(L, max_tile_l)
    nL = L // TILE_L
    multi_tile = nL > 1

    x_spec = pl.BlockSpec((1, C_in, TILE_L), lambda b, j: (b, 0, j))
    full = lambda a: pl.BlockSpec(a.shape, lambda b, j: (0,) * a.ndim)

    in_specs = [x_spec]
    args = [x]
    if multi_tile:
        # Second (HBM-resident) view of x for the 2-lane halo DMAs.
        in_specs.append(pl.BlockSpec(memory_space=pl.ANY))
        args.append(x)
    in_specs += [full(wc), full(bcat), full(w4_2d), full(b4col)]
    args += [wc, bcat, w4_2d, b4col]

    scratch = [pltpu.VMEM((C_in, TILE_L + 2 * _PAD), jnp.float32)]
    if multi_tile:
        scratch.append(pltpu.SemaphoreType.DMA((2,)))

    out = pl.pallas_call(
        functools.partial(_inception_kernel, multi_tile=multi_tile),
        out_shape=jax.ShapeDtypeStruct((B, out_ch, L), jnp.float32),
        grid=(B, nL),
        in_specs=in_specs,
        out_specs=pl.BlockSpec((1, out_ch, TILE_L), lambda b, j: (b, 0, j)),
        scratch_shapes=scratch,
        compiler_params=pltpu.CompilerParams(
            dimension_semantics=("parallel", "parallel"),
            vmem_limit_bytes=32 * 1024 * 1024),
    )(*args)
    return out


def make_params(key, in_ch, out_ch):
    """Synthetic Conv1d params in PyTorch layout: weight (out, in, K), bias (out,)."""
    assert out_ch % 4 == 0
    branch_ch = out_ch // 4
    ks = jax.random.split(key, 8)

    def conv_w(k, ksize):
        bound = 1.0 / math.sqrt(in_ch * ksize)
        return jax.random.uniform(k, (branch_ch, in_ch, ksize), jnp.float32,
                                  -bound, bound)

    def conv_b(k, ksize):
        bound = 1.0 / math.sqrt(in_ch * ksize)
        return jax.random.uniform(k, (branch_ch,), jnp.float32, -bound, bound)

    w1, b1 = conv_w(ks[0], 1), conv_b(ks[1], 1)
    w2, b2 = conv_w(ks[2], 3), conv_b(ks[3], 3)
    w3, b3 = conv_w(ks[4], 5), conv_b(ks[5], 5)
    w4, b4 = conv_w(ks[6], 1), conv_b(ks[7], 1)
    return (w1, b1, w2, b2, w3, b3, w4, b4)


def _reference(x, params):
    """Pure-JAX reference with identical semantics (NCL in / NCL out)."""
    w1, b1, w2, b2, w3, b3, w4, b4 = params
    B, C_in, L = x.shape
    hi = jax.lax.Precision.HIGHEST

    def conv(xin, w, b, pad):
        K = w.shape[-1]
        xp = jnp.pad(xin, ((0, 0), (0, 0), (pad, pad)))
        y = jnp.zeros((B, w.shape[0], L), jnp.float32)
        for t in range(K):
            y = y + jnp.einsum('oi,bil->bol', w[:, :, t], xp[:, :, t:t + L],
                               precision=hi)
        return y + b[None, :, None]

    y1 = conv(x, w1, b1, 0)
    y2 = conv(x, w2, b2, 1)
    y3 = conv(x, w3, b3, 2)
    neg = jnp.finfo(jnp.float32).min
    xp = jnp.pad(x, ((0, 0), (0, 0), (1, 1)), constant_values=neg)
    pooled = jnp.maximum(jnp.maximum(xp[:, :, 0:L], xp[:, :, 1:1 + L]),
                         xp[:, :, 2:2 + L])
    y4 = conv(pooled, w4, b4, 0)
    y = jnp.concatenate([y1, y2, y3, y4], axis=1)
    return jnp.maximum(y, 0.0)


if __name__ == "__main__":
    key = jax.random.PRNGKey(0)
    k_x, k_p, k_x2 = jax.random.split(key, 3)

    # Small shape (single L-tile path).
    B, C_in, L, out_ch = 2, 4, 16, 16
    x = jax.random.normal(k_x, (B, C_in, L), jnp.float32)
    params = make_params(k_p, C_in, out_ch)

    out = jax.block_until_ready(inception1d_pallas(x, params))
    ref = _reference(x, params)
    assert out.shape == (B, out_ch, L)
    assert jnp.allclose(out, ref, atol=1e-4, rtol=1e-4), "mismatch (single tile)"

    # Longer sequence exercising the L-tile grid axis + halo DMAs (4 tiles).
    L2 = 512
    x2 = jax.random.normal(k_x2, (B, C_in, L2), jnp.float32)
    out2 = jax.block_until_ready(inception1d_pallas(x2, params, max_tile_l=128))
    ref2 = _reference(x2, params)
    assert out2.shape == (B, out_ch, L2)
    assert jnp.allclose(out2, ref2, atol=1e-4, rtol=1e-4), "mismatch (L-tiled)"

    print("KERNEL_OK")
</pallas_src>

<mosaic_0001>
module attributes {stable_mosaic.version = 11 : i64} {
  func.func @_inception_kernel(%arg0: i32, %arg1: i32, %arg2: memref<1x4x16xf32, #tpu.memory_space<vmem>>, %arg3: memref<5x12x4xf32, #tpu.memory_space<vmem>>, %arg4: memref<12x1xf32, #tpu.memory_space<vmem>>, %arg5: memref<4x4xf32, #tpu.memory_space<vmem>>, %arg6: memref<4x1xf32, #tpu.memory_space<vmem>>, %arg7: memref<1x16x16xf32, #tpu.memory_space<vmem>>, %arg8: memref<4x272xf32, #tpu.memory_space<vmem>>) attributes {dimension_semantics = [#tpu.dimension_semantics<parallel>, #tpu.dimension_semantics<parallel>], iteration_bounds = array<i64: 2, 1>, scalar_prefetch = 0 : i64, scratch_operands = 1 : i64, tpu.core_type = #tpu.core_type<tc>, window_params = [{transform_indices = @transform_0, window_bounds = array<i64: 1, 4, 16>}, {pipeline_mode = #tpu.pipeline_mode<synchronous>, transform_indices = @transform_1, window_bounds = array<i64: 5, 12, 4>}, {pipeline_mode = #tpu.pipeline_mode<synchronous>, transform_indices = @transform_2, window_bounds = array<i64: 12, 1>}, {pipeline_mode = #tpu.pipeline_mode<synchronous>, transform_indices = @transform_3, window_bounds = array<i64: 4, 4>}, {pipeline_mode = #tpu.pipeline_mode<synchronous>, transform_indices = @transform_4, window_bounds = array<i64: 4, 1>}, {transform_indices = @transform_5, window_bounds = array<i64: 1, 16, 16>}]} {
    %c0_i32 = arith.constant 0 : i32
    %0 = arith.cmpi eq, %arg1, %c0_i32 : i32
    %1 = arith.extui %0 : i1 to i32
    %c0_i32_0 = arith.constant 0 : i32
    %2 = arith.cmpi ne, %1, %c0_i32_0 : i32
    scf.if %2 {
      %cst_47 = arith.constant 0.000000e+00 : f32
      %66 = vector.broadcast %cst_47 : f32 to vector<4x2xf32>
      %c0_48 = arith.constant 0 : index
      %c126_49 = arith.constant 126 : index
      %67 = vector.load %arg8[%c0_48, %c126_49] : memref<4x272xf32, #tpu.memory_space<vmem>>, vector<4x2xf32>
      tpu.vector_store %arg8[%c0_48, %c126_49], %66 {strides = array<i32>} : memref<4x272xf32, #tpu.memory_space<vmem>>, vector<4x2xf32>,
    } else {
    }
    %c0_i32_1 = arith.constant 0 : i32
    %3 = arith.cmpi eq, %arg1, %c0_i32_1 : i32
    %4 = arith.extui %3 : i1 to i32
    %c0_i32_2 = arith.constant 0 : i32
    %5 = arith.cmpi ne, %4, %c0_i32_2 : i32
    scf.if %5 {
      %cst_47 = arith.constant 0.000000e+00 : f32
      %66 = vector.broadcast %cst_47 : f32 to vector<4x2xf32>
      %c0_48 = arith.constant 0 : index
      %c144 = arith.constant 144 : index
      %67 = vector.load %arg8[%c0_48, %c144] : memref<4x272xf32, #tpu.memory_space<vmem>>, vector<4x2xf32>
      tpu.vector_store %arg8[%c0_48, %c144], %66 {strides = array<i32>} : memref<4x272xf32, #tpu.memory_space<vmem>>, vector<4x2xf32>,
    } else {
    }
    %c0 = arith.constant 0 : index
    %c0_3 = arith.constant 0 : index
    %c0_4 = arith.constant 0 : index
    %6 = vector.load %arg2[%c0, %c0_3, %c0_4] : memref<1x4x16xf32, #tpu.memory_space<vmem>>, vector<1x4x16xf32>
    %7 = vector.shape_cast %6 : vector<1x4x16xf32> to vector<4x16xf32>
    %c0_5 = arith.constant 0 : index
    %c128 = arith.constant 128 : index
    %8 = vector.load %arg8[%c0_5, %c128] : memref<4x272xf32, #tpu.memory_space<vmem>>, vector<4x16xf32>
    tpu.vector_store %arg8[%c0_5, %c128], %7 {strides = array<i32>} : memref<4x272xf32, #tpu.memory_space<vmem>>, vector<4x16xf32>,
    %c0_6 = arith.constant 0 : index
    %c0_7 = arith.constant 0 : index
    %c0_8 = arith.constant 0 : index
    %9 = vector.load %arg3[%c0_6, %c0_7, %c0_8] : memref<5x12x4xf32, #tpu.memory_space<vmem>>, vector<1x12x4xf32>
    %10 = vector.shape_cast %9 : vector<1x12x4xf32> to vector<12x4xf32>
    %c0_9 = arith.constant 0 : index
    %c126 = arith.constant 126 : index
    %11 = vector.load %arg8[%c0_9, %c126] : memref<4x272xf32, #tpu.memory_space<vmem>>, vector<4x16xf32>
    %cst = arith.constant dense<0.000000e+00> : vector<12x16xf32>
    %12 = tpu.matmul %10, %11, %cst {dimension_numbers = #tpu.dot_dimension_numbers<[1], [0], [0], [1], [0, 0, 1, 1], [], []>} : vector<12x4xf32>, vector<4x16xf32>, vector<12x16xf32> -> vector<12x16xf32>
    %c1 = arith.constant 1 : index
    %c0_10 = arith.constant 0 : index
    %c0_11 = arith.constant 0 : index
    %13 = vector.load %arg3[%c1, %c0_10, %c0_11] : memref<5x12x4xf32, #tpu.memory_space<vmem>>, vector<1x12x4xf32>
    %14 = vector.shape_cast %13 : vector<1x12x4xf32> to vector<12x4xf32>
    %c0_12 = arith.constant 0 : index
    %c127 = arith.constant 127 : index
    %15 = vector.load %arg8[%c0_12, %c127] : memref<4x272xf32, #tpu.memory_space<vmem>>, vector<4x16xf32>
    %cst_13 = arith.constant dense<0.000000e+00> : vector<12x16xf32>
    %16 = tpu.matmul %14, %15, %cst_13 {dimension_numbers = #tpu.dot_dimension_numbers<[1], [0], [0], [1], [0, 0, 1, 1], [], []>} : vector<12x4xf32>, vector<4x16xf32>, vector<12x16xf32> -> vector<12x16xf32>
    %17 = arith.addf %12, %16 : vector<12x16xf32>
    %c2 = arith.constant 2 : index
    %c0_14 = arith.constant 0 : index
    %c0_15 = arith.constant 0 : index
    %18 = vector.load %arg3[%c2, %c0_14, %c0_15] : memref<5x12x4xf32, #tpu.memory_space<vmem>>, vector<1x12x4xf32>
    %19 = vector.shape_cast %18 : vector<1x12x4xf32> to vector<12x4xf32>
    %c0_16 = arith.constant 0 : index
    %c128_17 = arith.constant 128 : index
    %20 = vector.load %arg8[%c0_16, %c128_17] : memref<4x272xf32, #tpu.memory_space<vmem>>, vector<4x16xf32>
    %cst_18 = arith.constant dense<0.000000e+00> : vector<12x16xf32>
    %21 = tpu.matmul %19, %20, %cst_18 {dimension_numbers = #tpu.dot_dimension_numbers<[1], [0], [0], [1], [0, 0, 1, 1], [], []>} : vector<12x4xf32>, vector<4x16xf32>, vector<12x16xf32> -> vector<12x16xf32>
    %22 = arith.addf %17, %21 : vector<12x16xf32>
    %c3 = arith.constant 3 : index
    %c0_19 = arith.constant 0 : index
    %c0_20 = arith.constant 0 : index
    %23 = vector.load %arg3[%c3, %c0_19, %c0_20] : memref<5x12x4xf32, #tpu.memory_space<vmem>>, vector<1x12x4xf32>
    %24 = vector.shape_cast %23 : vector<1x12x4xf32> to vector<12x4xf32>
    %c0_21 = arith.constant 0 : index
    %c129 = arith.constant 129 : index
    %25 = vector.load %arg8[%c0_21, %c129] : memref<4x272xf32, #tpu.memory_space<vmem>>, vector<4x16xf32>
    %cst_22 = arith.constant dense<0.000000e+00> : vector<12x16xf32>
    %26 = tpu.matmul %24, %25, %cst_22 {dimension_numbers = #tpu.dot_dimension_numbers<[1], [0], [0], [1], [0, 0, 1, 1], [], []>} : vector<12x4xf32>, vector<4x16xf32>, vector<12x16xf32> -> vector<12x16xf32>
    %27 = arith.addf %22, %26 : vector<12x16xf32>
    %c4 = arith.constant 4 : index
    %c0_23 = arith.constant 0 : index
    %c0_24 = arith.constant 0 : index
    %28 = vector.load %arg3[%c4, %c0_23, %c0_24] : memref<5x12x4xf32, #tpu.memory_space<vmem>>, vector<1x12x4xf32>
    %29 = vector.shape_cast %28 : vector<1x12x4xf32> to vector<12x4xf32>
    %c0_25 = arith.constant 0 : index
    %c130 = arith.constant 130 : index
    %30 = vector.load %arg8[%c0_25, %c130] : memref<4x272xf32, #tpu.memory_space<vmem>>, vector<4x16xf32>
    %cst_26 = arith.constant dense<0.000000e+00> : vector<12x16xf32>
    %31 = tpu.matmul %29, %30, %cst_26 {dimension_numbers = #tpu.dot_dimension_numbers<[1], [0], [0], [1], [0, 0, 1, 1], [], []>} : vector<12x4xf32>, vector<4x16xf32>, vector<12x16xf32> -> vector<12x16xf32>
    %32 = arith.addf %27, %31 : vector<12x16xf32>
    %c0_27 = arith.constant 0 : index
    %c0_28 = arith.constant 0 : index
    %33 = vector.load %arg4[%c0_27, %c0_28] : memref<12x1xf32, #tpu.memory_space<vmem>>, vector<12x1xf32>
    %34 = vector.broadcast %33 : vector<12x1xf32> to vector<12x16xf32>
    %35 = arith.addf %32, %34 : vector<12x16xf32>
    %c0_29 = arith.constant 0 : index
    %c127_30 = arith.constant 127 : index
    %36 = vector.load %arg8[%c0_29, %c127_30] : memref<4x272xf32, #tpu.memory_space<vmem>>, vector<4x16xf32>
    %c0_31 = arith.constant 0 : index
    %c128_32 = arith.constant 128 : index
    %37 = vector.load %arg8[%c0_31, %c128_32] : memref<4x272xf32, #tpu.memory_space<vmem>>, vector<4x16xf32>
    %c0_33 = arith.constant 0 : index
    %c129_34 = arith.constant 129 : index
    %38 = vector.load %arg8[%c0_33, %c129_34] : memref<4x272xf32, #tpu.memory_space<vmem>>, vector<4x16xf32>
    %39 = arith.maximumf %36, %37 : vector<4x16xf32>
    %40 = arith.maximumf %37, %38 : vector<4x16xf32>
    %41 = arith.maximumf %39, %38 : vector<4x16xf32>
    %42 = tpu.iota {dimensions = array<i32: 1>} : vector<4x16xi32>
    %c0_i32_35 = arith.constant 0 : i32
    %43 = arith.cmpi eq, %arg1, %c0_i32_35 : i32
    %c0_i32_36 = arith.constant 0 : i32
    %44 = vector.broadcast %c0_i32_36 : i32 to vector<4x16xi32>
    %45 = arith.cmpi eq, %42, %44 : vector<4x16xi32>
    %46 = vector.broadcast %43 : i1 to vector<4x16xi1>
    %47 = arith.andi %46, %45 : vector<4x16xi1>
    %48 = arith.select %47, %40, %41 : vector<4x16xi1>, vector<4x16xf32>
    %c0_i32_37 = arith.constant 0 : i32
    %49 = arith.cmpi eq, %arg1, %c0_i32_37 : i32
    %c15_i32 = arith.constant 15 : i32
    %50 = vector.broadcast %c15_i32 : i32 to vector<4x16xi32>
    %51 = arith.cmpi eq, %42, %50 : vector<4x16xi32>
    %52 = vector.broadcast %49 : i1 to vector<4x16xi1>
    %53 = arith.andi %52, %51 : vector<4x16xi1>
    %54 = arith.select %53, %39, %48 : vector<4x16xi1>, vector<4x16xf32>
    %c0_38 = arith.constant 0 : index
    %c0_39 = arith.constant 0 : index
    %55 = vector.load %arg5[%c0_38, %c0_39] : memref<4x4xf32, #tpu.memory_space<vmem>>, vector<4x4xf32>
    %cst_40 = arith.constant dense<0.000000e+00> : vector<4x16xf32>
    %56 = tpu.matmul %55, %54, %cst_40 {dimension_numbers = #tpu.dot_dimension_numbers<[1], [0], [0], [1], [0, 0, 1, 1], [], []>} : vector<4x4xf32>, vector<4x16xf32>, vector<4x16xf32> -> vector<4x16xf32>
    %c0_41 = arith.constant 0 : index
    %c0_42 = arith.constant 0 : index
    %57 = vector.load %arg6[%c0_41, %c0_42] : memref<4x1xf32, #tpu.memory_space<vmem>>, vector<4x1xf32>
    %58 = vector.broadcast %57 : vector<4x1xf32> to vector<4x16xf32>
    %59 = arith.addf %56, %58 : vector<4x16xf32>
    %60 = tpu.concatenate %35, %59 in 0 : vector<12x16xf32>, vector<4x16xf32> -> vector<16x16xf32>
    %cst_43 = arith.constant 0.000000e+00 : f32
    %61 = vector.broadcast %cst_43 : f32 to vector<16x16xf32>
    %62 = arith.maximumf %60, %61 : vector<16x16xf32>
    %c0_44 = arith.constant 0 : index
    %c0_45 = arith.constant 0 : index
    %c0_46 = arith.constant 0 : index
    %63 = vector.load %arg7[%c0_44, %c0_45, %c0_46] : memref<1x16x16xf32, #tpu.memory_space<vmem>>, vector<1x16x16xf32>
    %64 = vector.shape_cast %63 : vector<1x16x16xf32> to vector<16x16xf32>
    %65 = vector.shape_cast %62 : vector<16x16xf32> to vector<1x16x16xf32>
    tpu.vector_store %arg7[%c0_44, %c0_45, %c0_46], %65 {strides = array<i32>} : memref<1x16x16xf32, #tpu.memory_space<vmem>>, vector<1x16x16xf32>,
    return
  }
  func.func @transform_0(%arg0: i32, %arg1: i32) -> (i32, i32, i32) {
    %c0_i32 = arith.constant 0 : i32
    %c0_i32_0 = arith.constant 0 : i32
    return %arg0, %c0_i32, %arg1 : i32, i32, i32
  }
  func.func @transform_1(%arg0: i32, %arg1: i32) -> (i32, i32, i32) {
    %c0_i32 = arith.constant 0 : i32
    %c0_i32_0 = arith.constant 0 : i32
    %c0_i32_1 = arith.constant 0 : i32
    %c0_i32_2 = arith.constant 0 : i32
    return %c0_i32, %c0_i32_0, %c0_i32_1 : i32, i32, i32
  }
  func.func @transform_2(%arg0: i32, %arg1: i32) -> (i32, i32) {
    %c0_i32 = arith.constant 0 : i32
    %c0_i32_0 = arith.constant 0 : i32
    %c0_i32_1 = arith.constant 0 : i32
    return %c0_i32, %c0_i32_0 : i32, i32
  }
  func.func @transform_3(%arg0: i32, %arg1: i32) -> (i32, i32) {
    %c0_i32 = arith.constant 0 : i32
    %c0_i32_0 = arith.constant 0 : i32
    %c0_i32_1 = arith.constant 0 : i32
    return %c0_i32, %c0_i32_0 : i32, i32
  }
  func.func @transform_4(%arg0: i32, %arg1: i32) -> (i32, i32) {
    %c0_i32 = arith.constant 0 : i32
    %c0_i32_0 = arith.constant 0 : i32
    %c0_i32_1 = arith.constant 0 : i32
    return %c0_i32, %c0_i32_0 : i32, i32
  }
  func.func @transform_5(%arg0: i32, %arg1: i32) -> (i32, i32, i32) {
    %c0_i32 = arith.constant 0 : i32
    %c0_i32_0 = arith.constant 0 : i32
    return %arg0, %c0_i32, %arg1 : i32, i32, i32
  }
}

</mosaic_0001>

<llo_original>
// kernel: tpu_custom_call.1
$region0: #{tpu_custom_call.1}
  #allocation0 [shape = 'u32[]', space=smem, size = 0x4, offset = 0x4, fixed_abs, tag = 'smem constant byte address 0x4 - core index']
  #allocation1 [shape = 'u32[72,128]{1,0:T(1,128)}', space=vmem, size = 0x9000, scoped, tag = 'internal scratch']
  #allocation2 [shape = 'f32[4,272]{1,0:T(4,128)}', space=vmem, size = 0x1800, scoped, tag = 'scratch operand']
  %s0 = inlined_call_operand.vmem [shape: f32[2,4,16], index: 0, kind: input, shape index: {}]
  %s1 = inlined_call_operand.vmem [shape: f32[5,12,4], index: 1, kind: input, shape index: {}]
  %s2 = inlined_call_operand.vmem [shape: f32[12,1], index: 2, kind: input, shape index: {}]
  %s3 = inlined_call_operand.vmem [shape: f32[4,4], index: 3, kind: input, shape index: {}]
  %s4 = inlined_call_operand.vmem [shape: f32[4,1], index: 4, kind: input, shape index: {}]
  %s5 = inlined_call_operand.hbm [shape: f32[2,16,16], index: 5, kind: output, shape index: {}]
  %s6 = sld [smem:[#allocation0]]
  $region57: #{tpu_custom_call.1} parent=0
    _
  %s8 = ssub.s32 1, %s6
  %s9 = scalar_select 0, %s8, %s6
  $region1: #{tpu_custom_call.1} parent=0
    #allocation3 [shape = 'u8[16384]{0}', space=vmem, size = 0x4000, scoped, tag = 'output window, operand 0']
    #allocation4 [shape = 's32[2]{0}', space=sflag, size = 0x8, scoped, tag = 'scoped memory for tpu_custom_call.1']
    %10 = vsyncpa [#allocation4], 0
    %s11 = scalar_lea.sflag [#allocation4], 1
    %12 = vsyncpa %s11, 0
    loop: start=0, step=1, limit=4
    $region2: #{tpu_custom_call.1} parent=1 // loop_pre_header
      _
    $region3: #{tpu_custom_call.1} parent=1 // loop_header
      %s14 = sphi 0, %s18
      %p15 = scmp.ge.s32.totalorder %s14, 4
      %s21 = sphi 0, %s33
      %s22 = sphi 0, %s29
      %s23 = sphi 0, %s21
      %s24 = sphi 0, %s22
      %s25 = sphi 0, %s23
      %s26 = sphi 0, %s24
      %s38 = sphi 0, %s40
      %s41 = sphi 0, %s38
      %s42 = sphi 0, %s41
      %s58 = sphi 0, %s42
      %s62 = sphi 0, %s62
      %s64 = sphi 0, %s62
      %s65 = sphi 0, %s64
      %s79 = sphi 0, %s65
      %s83 = sphi 0, %s83
      %s85 = sphi 0, %s83
      %s86 = sphi 0, %s85
      %s100 = sphi 0, %s86
      %s104 = sphi 0, %s104
      %s106 = sphi 0, %s104
      %s107 = sphi 0, %s106
      %s121 = sphi 0, %s107
      %s125 = sphi 0, %s125
      %s127 = sphi 0, %s125
      %s128 = sphi 0, %s127
      %s142 = sphi 0, %s128
      %s150 = sphi 0, %s152
      %s153 = sphi 0, %s150
      %s154 = sphi 0, %s153
      %s170 = sphi 0, %s154
    $region4: #{tpu_custom_call.1} parent=1 // loop_header_branch
      %17 = sbr.rel (%p15) target = $region8
    $region5: #{tpu_custom_call.1} parent=1 // loop_body
      %s19 = ssub.s32 %s14, 1
      %s20 = ssub.s32 %s14, 2
      %s27 = sadd.s32 1, %s22
      %p28 = scmp.ge.s32.totalorder %s27, 1
      %s29 = scalar_select %p28, 0, %s27
      %s30 = sadd.s32 1, %s21
      %s31 = scalar_select %p28, %s30, %s21
      %p32 = scmp.ge.s32.totalorder %s31, 2
      %s33 = scalar_select %p32, 0, %s31
      %s34 = ssub.s32 %s21, %s33
      %s35 = ssub.s32 %s22, %s29
      %s36 = sor.u32 %s34, %s35
      %p37 = scmp.eq.s32.totalorder %s36, 0
      %s39 = sadd.s32 %s38, 1
      %s40 = scalar_select %p37, %s38, %s39
      %p43 = pneg %p37
      %p44 = scmp.eq.s32.totalorder %s14, 1
      %p45 = por %p43, %p44
      %p46 = scmp.ne.s32.totalorder %s38, %s41
      %p47 = scmp.eq.s32.totalorder %s14, 0
      %p48 = por %p46, %p47
      %p49 = scmp.ne.s32.totalorder %s38, %s41
      %p50 = scmp.eq.s32.totalorder %s19, 1
      %p51 = por %p49, %p50
      %p52 = scmp.ne.s32.totalorder %s41, %s42
      %p53 = scmp.eq.s32.totalorder %s19, 0
      %p54 = por %p52, %p53
      %p55 = scmp.ne.s32.totalorder %s41, %s42
      %p56 = scmp.eq.s32.totalorder %s20, 1
      %p57 = por %p55, %p56
      %p59 = scmp.ne.s32.totalorder %s42, %s58
      %p60 = scmp.eq.s32.totalorder %s20, 0
      %p61 = por %p59, %p60
      %s63 = sadd.s32 %s62, 1
      %p66 = scmp.eq.s32.totalorder %s14, 1
      %p67 = scmp.ne.s32.totalorder %s62, %s64
      %p68 = scmp.eq.s32.totalorder %s14, 0
      %p69 = por %p67, %p68
      %p70 = scmp.ne.s32.totalorder %s62, %s64
      %p71 = scmp.eq.s32.totalorder %s19, 1
      %p72 = por %p70, %p71
      %p73 = scmp.ne.s32.totalorder %s64, %s65
      %p74 = scmp.eq.s32.totalorder %s19, 0
      %p75 = por %p73, %p74
      %p76 = scmp.ne.s32.totalorder %s64, %s65
      %p77 = scmp.eq.s32.totalorder %s20, 1
      %p78 = por %p76, %p77
      %p80 = scmp.ne.s32.totalorder %s65, %s79
      %p81 = scmp.eq.s32.totalorder %s20, 0
      %p82 = por %p80, %p81
      %s84 = sadd.s32 %s83, 1
      %p87 = scmp.eq.s32.totalorder %s14, 1
      %p88 = scmp.ne.s32.totalorder %s83, %s85
      %p89 = scmp.eq.s32.totalorder %s14, 0
      %p90 = por %p88, %p89
      %p91 = scmp.ne.s32.totalorder %s83, %s85
      %p92 = scmp.eq.s32.totalorder %s19, 1
      %p93 = por %p91, %p92
      %p94 = scmp.ne.s32.totalorder %s85, %s86
      %p95 = scmp.eq.s32.totalorder %s19, 0
      %p96 = por %p94, %p95
      %p97 = scmp.ne.s32.totalorder %s85, %s86
      %p98 = scmp.eq.s32.totalorder %s20, 1
      %p99 = por %p97, %p98
      %p101 = scmp.ne.s32.totalorder %s86, %s100
      %p102 = scmp.eq.s32.totalorder %s20, 0
      %p103 = por %p101, %p102
      %s105 = sadd.s32 %s104, 1
      %p108 = scmp.eq.s32.totalorder %s14, 1
      %p109 = scmp.ne.s32.totalorder %s104, %s106
      %p110 = scmp.eq.s32.totalorder %s14, 0
      %p111 = por %p109, %p110
      %p112 = scmp.ne.s32.totalorder %s104, %s106
      %p113 = scmp.eq.s32.totalorder %s19, 1
      %p114 = por %p112, %p113
      %p115 = scmp.ne.s32.totalorder %s106, %s107
      %p116 = scmp.eq.s32.totalorder %s19, 0
      %p117 = por %p115, %p116
      %p118 = scmp.ne.s32.totalorder %s106, %s107
      %p119 = scmp.eq.s32.totalorder %s20, 1
      %p120 = por %p118, %p119
      %p122 = scmp.ne.s32.totalorder %s107, %s121
      %p123 = scmp.eq.s32.totalorder %s20, 0
      %p124 = por %p122, %p123
      %s126 = sadd.s32 %s125, 1
      %p129 = scmp.eq.s32.totalorder %s14, 1
      %p130 = scmp.ne.s32.totalorder %s125, %s127
      %p131 = scmp.eq.s32.totalorder %s14, 0
      %p132 = por %p130, %p131
      %p133 = scmp.ne.s32.totalorder %s125, %s127
      %p134 = scmp.eq.s32.totalorder %s19, 1
      %p135 = por %p133, %p134
      %p136 = scmp.ne.s32.totalorder %s127, %s128
      %p137 = scmp.eq.s32.totalorder %s19, 0
      %p138 = por %p136, %p137
      %p139 = scmp.ne.s32.totalorder %s127, %s128
      %p140 = scmp.eq.s32.totalorder %s20, 1
      %p141 = por %p139, %p140
      %p143 = scmp.ne.s32.totalorder %s128, %s142
      %p144 = scmp.eq.s32.totalorder %s20, 0
      %p145 = por %p143, %p144
      %s146 = ssub.s32 %s21, %s33
      %s147 = ssub.s32 %s22, %s29
      %s148 = sor.u32 %s146, %s147
      %p149 = scmp.eq.s32.totalorder %s148, 0
      %s151 = sadd.s32 %s150, 1
      %s152 = scalar_select %p149, %s150, %s151
      %p155 = pneg %p149
      %p156 = scmp.eq.s32.totalorder %s14, 1
      %p157 = por %p155, %p156
      %p158 = scmp.ne.s32.totalorder %s150, %s153
      %p159 = scmp.eq.s32.totalorder %s14, 0
      %p160 = por %p158, %p159
      %p161 = scmp.ne.s32.totalorder %s150, %s153
      %p162 = scmp.eq.s32.totalorder %s19, 1
      %p163 = por %p161, %p162
      %p164 = scmp.ne.s32.totalorder %s153, %s154
      %p165 = scmp.eq.s32.totalorder %s19, 0
      %p166 = por %p164, %p165
      %p167 = scmp.ne.s32.totalorder %s153, %s154
      %p168 = scmp.eq.s32.totalorder %s20, 1
      %p169 = por %p167, %p168
      %p171 = scmp.ne.s32.totalorder %s154, %s170
      %p172 = scmp.eq.s32.totalorder %s20, 0
      %p173 = por %p171, %p172
      %p174 = scmp.le.s32.totalorder 1, %s14
      %p175 = scmp.lt.s32.totalorder %s14, 3
      %p176 = pnand %p174, %p175
      %p177 = pneg %p176
      // Predicated region
      $region9: #{tpu_custom_call.1} parent=5 // pred_check
        _
      $region10: #{tpu_custom_call.1} parent=5 // pred_check_branch
        %179 = sbr.rel (%p176) target = $region12
      $region11: #{tpu_custom_call.1} parent=5 // pred_region
        %s180 = ssub.s32 %s14, 1
        // Predicated region
        $region13: #{tpu_custom_call.1} parent=11 // pred_check
          %p181 = pneg %p75
        $region14: #{tpu_custom_call.1} parent=11 // pred_check_branch
          %183 = sbr.rel (%p181) target = $region16
        $region15: #{tpu_custom_call.1} parent=11 // pred_region
          _
        $region16: #{tpu_custom_call.1} parent=11 // pred_fallthru
          _
        // Predicated region
        $region17: #{tpu_custom_call.1} parent=11 // pred_check
          %p184 = pneg %p96
        $region18: #{tpu_custom_call.1} parent=11 // pred_check_branch
          %186 = sbr.rel (%p184) target = $region20
        $region19: #{tpu_custom_call.1} parent=11 // pred_region
          _
        $region20: #{tpu_custom_call.1} parent=11 // pred_fallthru
          _
        // Predicated region
        $region21: #{tpu_custom_call.1} parent=11 // pred_check
          %p187 = pneg %p117
        $region22: #{tpu_custom_call.1} parent=11 // pred_check_branch
          %189 = sbr.rel (%p187) target = $region24
        $region23: #{tpu_custom_call.1} parent=11 // pred_region
          _
        $region24: #{tpu_custom_call.1} parent=11 // pred_fallthru
          _
        // Predicated region
        $region25: #{tpu_custom_call.1} parent=11 // pred_check
          %p190 = pneg %p138
        $region26: #{tpu_custom_call.1} parent=11 // pred_check_branch
          %192 = sbr.rel (%p190) target = $region28
        $region27: #{tpu_custom_call.1} parent=11 // pred_region
          _
        $region28: #{tpu_custom_call.1} parent=11 // pred_fallthru
          _
      $region12: #{tpu_custom_call.1} parent=5 // pred_fallthru
        _
      %p193 = scmp.lt.s32.totalorder %s14, 2
      // Predicated region
      $region29: #{tpu_custom_call.1} parent=5 // pred_check
        %p194 = pneg %p193
      $region30: #{tpu_custom_call.1} parent=5 // pred_check_branch
        %196 = sbr.rel (%p194) target = $region32
      $region31: #{tpu_custom_call.1} parent=5 // pred_region
        // Predicated region
        $region33: #{tpu_custom_call.1} parent=31 // pred_check
          %p197 = pneg %p48
        $region34: #{tpu_custom_call.1} parent=31 // pred_check_branch
          %199 = sbr.rel (%p197) target = $region36
        $region35: #{tpu_custom_call.1} parent=31 // pred_region
          %p200 = scmp.lt.s32.totalorder %s21, 1
          %s201 = scalar_select %p200, %s21, 1
          %p202 = scmp.lt.s32.totalorder %s22, 0
          %s203 = scalar_select %p202, %s22, 0
          %s204 = sadd.s32 %s203, %s201
          %s205 = smul.addr %s204, 4
          %s206 = scalar_lea.vmem %s0, %s205
        $region36: #{tpu_custom_call.1} parent=31 // pred_fallthru
          _
      $region32: #{tpu_custom_call.1} parent=5 // pred_fallthru
        _
      %p207 = scmp.le.s32.totalorder 1, %s14
      %p208 = scmp.lt.s32.totalorder %s14, 3
      %p209 = pnand %p207, %p208
      %p210 = pneg %p209
      // Predicated region
      $region37: #{tpu_custom_call.1} parent=5 // pred_check
        _
      $region38: #{tpu_custom_call.1} parent=5 // pred_check_branch
        %212 = sbr.rel (%p209) target = $region40
      $region39: #{tpu_custom_call.1} parent=5 // pred_region
        %s213 = ssub.s32 %s14, 1
        %p214 = scmp.lt.s32.totalorder %s23, 1
        %s215 = scalar_select %p214, %s23, 1
        %p216 = scmp.lt.s32.totalorder %s24, 0
        %s217 = scalar_select %p216, %s24, 0
        %s218 = sadd.s32 %s217, %s215
        %s219 = smul.addr %s218, 4
        %s220 = scalar_lea.vmem %s0, %s219
        %p221 = pneg %p54
        %p222 = pneg %p51
        %p223 = pneg %p75
        %p224 = pneg %p72
        %p225 = pneg %p96
        %p226 = pneg %p93
        %p227 = pneg %p117
        %p228 = pneg %p114
        %p229 = pneg %p138
        %p230 = pneg %p135
        %p231 = pneg %p166
        %p232 = pneg %p163
        %s233 = sand.u32 %s153, 1
        %s234 = scalar_lea.sflag [#allocation4], %s233
        %s235 = sand.u32 %s153, 1
        %s236 = smul.addr %s235, 16
        %s237 = scalar_lea.vmem [#allocation3], %s236
        %p238 = scmp.lt.s32.totalorder %s23, 1
        %s239 = scalar_select %p238, %s23, 1
        %p240 = scmp.lt.s32.totalorder %s24, 0
        %s241 = scalar_select %p240, %s24, 0
        %s242 = sadd.s32 %s241, %s239
        %s243 = smul.addr %s242, 4
        %s244 = scalar_lea.vmem %s0, %s243
        %p245 = scmp.eq.s32.totalorder %s24, 0
        // Predicated region
        $region41: #{tpu_custom_call.1} parent=39 // pred_check
          %p246 = pneg %p245
        $region42: #{tpu_custom_call.1} parent=39 // pred_check_branch
          %248 = sbr.rel (%p246) target = $region44
        $region43: #{tpu_custom_call.1} parent=39 // pred_region
          %vm249 = vcmask 1044464
          %250 = vst.msk [vmem:[#allocation2] sm:$0xf] %vm249, 0.0
          %vm251 = vcmask 142464
          %252 = vst.msk [vmem:[#allocation2 + $0x4] sm:$0xf] %vm251, 0.0
        $region44: #{tpu_custom_call.1} parent=39 // pred_fallthru
          _
        %v253 = vld [vmem:[%s244] sm:$0xf]
        %vm254 = vcmask 125952
        %255 = vst.msk [vmem:[#allocation2 + $0x4] sm:$0xf] %vm254, %v253
        %v256 = vld [vmem:[%s1] sm:$0xff]
        %v257 = vld [vmem:[%s1 + $0x8] sm:$0xf]
        %v258 = vld [vmem:[#allocation2] sm:$0xff]
        %s259 = scalar_lea.vmem %s1, 16
        %v260 = vld [vmem:[%s259] sm:$0xff]
        %v261 = vld [vmem:[%s259 + $0x8] sm:$0xf]
        %263 = vst [vmem:[#allocation1] ss:$2 sm:$0xff] %v258
        %v264 = vld.sshfl [vmem:[#allocation1] sm:$0xff pattern:$0x75316420]
        %v265 = vld.sshfl [vmem:[#allocation1 + $0x8] sm:$0xff pattern:$0x75316420]
        %266 = vrot.lane.b32.xlu0 %v264, 1
        %v267 = vpop.permute.xlu0 %266
        %268 = vrot.lane.b32.xlu0 %v265, 1
        %v269 = vpop.permute.xlu0 %268
        %vm270 = vcmask 7168
        %v271 = vsel %vm270, %v267, %v269
        %vm272 = vcmask 31744
        %v274 = vsel %vm272, %v260, 0
        %v277 = vsel %vm272, %v261, 0
        %vm279 = vcmask 1043456
        %v280 = vsel %vm279, %v271, 0
        %282 = vmatpush.msra.mxu0 0.0
        %283 = vmatpush.msra.mxu0 0.0
        %284 = vmatpush.msra.mxu0 0.0
        %285 = vmatpush.msra.mxu0 0.0
        %286 = vmatpush.msra.mxu0 0.0
        %287 = vmatpush.msra.mxu0 0.0
        %288 = vmatpush.msra.mxu0 0.0
        %289 = vmatpush.msra.mxu0 0.0
        %290 = vmatpush.msra.mxu0 0.0
        %291 = vmatpush.msra.mxu0 0.0
        %292 = vmatpush.msra.mxu0 0.0
        %293 = vmatpush.msra.mxu0 0.0
        %294 = vmatpush.msra.mxu0 0.0
        %295 = vmatpush.msra.mxu0 0.0
        %296 = vmatpush.msra.mxu0 0.0
        %297 = vmatpush.msra.mxu0 %v280
        %298 = vmatmul.f32.gmra.mxu0 %v274
        %v299 = vpop.f32.mrf.mxu0
        %v300 = vadd.f32 0.0, %v299
        %301 = vmatmul.f32.gmra.mxu0 %v277
        %v302 = vpop.f32.mrf.mxu0
        %v303 = vadd.f32 0.0, %v302
        %304 = vdwg.mxu0
        %305 = vst [vmem:[#allocation1] ss:$2 sm:$0xff] %v258
        %v306 = vld.sshfl [vmem:[#allocation1] sm:$0xff pattern:$0x75316420]
        %v307 = vld.sshfl [vmem:[#allocation1 + $0x8] sm:$0xff pattern:$0x75316420]
        %308 = vrot.lane.b32.xlu0 %v306, 2
        %v309 = vpop.permute.xlu0 %308
        %310 = vrot.lane.b32.xlu0 %v307, 2
        %v311 = vpop.permute.xlu0 %310
        %vm312 = vcmask 15360
        %v313 = vsel %vm312, %v309, %v311
        %v315 = vsel %vm272, %v256, 0
        %v318 = vsel %vm272, %v257, 0
        %v320 = vsel %vm279, %v313, 0
        %322 = vmatpush.msra.mxu0 0.0
        %323 = vmatpush.msra.mxu0 0.0
        %324 = vmatpush.msra.mxu0 0.0
        %325 = vmatpush.msra.mxu0 0.0
        %326 = vmatpush.msra.mxu0 0.0
        %327 = vmatpush.msra.mxu0 0.0
        %328 = vmatpush.msra.mxu0 0.0
        %329 = vmatpush.msra.mxu0 0.0
        %330 = vmatpush.msra.mxu0 0.0
        %331 = vmatpush.msra.mxu0 0.0
        %332 = vmatpush.msra.mxu0 0.0
        %333 = vmatpush.msra.mxu0 0.0
        %334 = vmatpush.msra.mxu0 0.0
        %335 = vmatpush.msra.mxu0 0.0
        %336 = vmatpush.msra.mxu0 0.0
        %337 = vmatpush.msra.mxu0 %v320
        %338 = vmatmul.f32.gmra.mxu0 %v315
        %v339 = vpop.f32.mrf.mxu0
        %v340 = vadd.f32 %v300, %v339
        %341 = vmatmul.f32.gmra.mxu0 %v318
        %v342 = vpop.f32.mrf.mxu0
        %v343 = vadd.f32 %v303, %v342
        %344 = vdwg.mxu0
        %s345 = scalar_lea.vmem %s1, 32
        %v346 = vld [vmem:[%s345] sm:$0xff]
        %v347 = vld [vmem:[%s345 + $0x8] sm:$0xf]
        %v348 = vld [vmem:[#allocation2 + $0x4] sm:$0xf]
        %v350 = vsel %vm272, %v346, 0
        %v353 = vsel %vm272, %v347, 0
        %v356 = vsel %vm279, %v348, 0
        %358 = vmatpush.msra.mxu0 0.0
        %359 = vmatpush.msra.mxu0 0.0
        %360 = vmatpush.msra.mxu0 0.0
        %361 = vmatpush.msra.mxu0 0.0
        %362 = vmatpush.msra.mxu0 0.0
        %363 = vmatpush.msra.mxu0 0.0
        %364 = vmatpush.msra.mxu0 0.0
        %365 = vmatpush.msra.mxu0 0.0
        %366 = vmatpush.msra.mxu0 0.0
        %367 = vmatpush.msra.mxu0 0.0
        %368 = vmatpush.msra.mxu0 0.0
        %369 = vmatpush.msra.mxu0 0.0
        %370 = vmatpush.msra.mxu0 0.0
        %371 = vmatpush.msra.mxu0 0.0
        %372 = vmatpush.msra.mxu0 0.0
        %373 = vmatpush.msra.mxu0 %v356
        %374 = vmatmul.f32.gmra.mxu0 %v350
        %v375 = vpop.f32.mrf.mxu0
        %v376 = vadd.f32 0.0, %v375
        %377 = vmatmul.f32.gmra.mxu0 %v353
        %v378 = vpop.f32.mrf.mxu0
        %v379 = vadd.f32 0.0, %v378
        %380 = vdwg.mxu0
        %v381 = vadd.f32 %v340, %v376
        %v382 = vadd.f32 %v343, %v379
        %s383 = scalar_lea.vmem %s1, 48
        %v384 = vld [vmem:[%s383] sm:$0xff]
        %v385 = vld [vmem:[%s383 + $0x8] sm:$0xf]
        %386 = vst [vmem:[#allocation1] ss:$2 sm:$0xff] %v348
        %v387 = vld.sshfl [vmem:[#allocation1] sm:$0xff pattern:$0x75316420]
        %388 = vrot.lane.b32.xlu0 %v387, 127
        %v389 = vpop.permute.xlu0 %388
        %v391 = vsel %vm272, %v384, 0
        %v394 = vsel %vm272, %v385, 0
        %v396 = vsel %vm279, %v389, 0
        %398 = vmatpush.msra.mxu0 0.0
        %399 = vmatpush.msra.mxu0 0.0
        %400 = vmatpush.msra.mxu0 0.0
        %401 = vmatpush.msra.mxu0 0.0
        %402 = vmatpush.msra.mxu0 0.0
        %403 = vmatpush.msra.mxu0 0.0
        %404 = vmatpush.msra.mxu0 0.0
        %405 = vmatpush.msra.mxu0 0.0
        %406 = vmatpush.msra.mxu0 0.0
        %407 = vmatpush.msra.mxu0 0.0
        %408 = vmatpush.msra.mxu0 0.0
        %409 = vmatpush.msra.mxu0 0.0
        %410 = vmatpush.msra.mxu0 0.0
        %411 = vmatpush.msra.mxu0 0.0
        %412 = vmatpush.msra.mxu0 0.0
        %413 = vmatpush.msra.mxu0 %v396
        %414 = vmatmul.f32.gmra.mxu0 %v391
        %v415 = vpop.f32.mrf.mxu0
        %v416 = vadd.f32 0.0, %v415
        %417 = vmatmul.f32.gmra.mxu0 %v394
        %v418 = vpop.f32.mrf.mxu0
        %v419 = vadd.f32 0.0, %v418
        %420 = vdwg.mxu0
        %v421 = vadd.f32 %v381, %v416
        %v422 = vadd.f32 %v382, %v419
        %s423 = scalar_lea.vmem %s1, 64
        %v424 = vld [vmem:[%s423] sm:$0xff]
        %v425 = vld [vmem:[%s423 + $0x8] sm:$0xf]
        %v426 = vld [vmem:[#allocation2 + $0x4] sm:$0xf]
        %428 = vst [vmem:[#allocation1] ss:$2 sm:$0xff] %v426
        %v429 = vld.sshfl [vmem:[#allocation1] sm:$0xff pattern:$0x75316420]
        %430 = vrot.lane.b32.xlu0 %v429, 126
        %v431 = vpop.permute.xlu0 %430
        %v433 = vsel %vm272, %v424, 0
        %v436 = vsel %vm272, %v425, 0
        %v438 = vsel %vm279, %v431, 0
        %440 = vmatpush.msra.mxu0 0.0
        %441 = vmatpush.msra.mxu0 0.0
        %442 = vmatpush.msra.mxu0 0.0
        %443 = vmatpush.msra.mxu0 0.0
        %444 = vmatpush.msra.mxu0 0.0
        %445 = vmatpush.msra.mxu0 0.0
        %446 = vmatpush.msra.mxu0 0.0
        %447 = vmatpush.msra.mxu0 0.0
        %448 = vmatpush.msra.mxu0 0.0
        %449 = vmatpush.msra.mxu0 0.0
        %450 = vmatpush.msra.mxu0 0.0
        %451 = vmatpush.msra.mxu0 0.0
        %452 = vmatpush.msra.mxu0 0.0
        %453 = vmatpush.msra.mxu0 0.0
        %454 = vmatpush.msra.mxu0 0.0
        %455 = vmatpush.msra.mxu0 %v438
        %456 = vmatmul.f32.gmra.mxu0 %v433
        %v457 = vpop.f32.mrf.mxu0
        %v458 = vadd.f32 0.0, %v457
        %459 = vmatmul.f32.gmra.mxu0 %v436
        %v460 = vpop.f32.mrf.mxu0
        %v461 = vadd.f32 0.0, %v460
        %462 = vdwg.mxu0
        %v463 = vadd.f32 %v421, %v458
        %v464 = vadd.f32 %v422, %v461
        %v465 = vld [vmem:[%s2] sm:$0xff]
        %v466 = vld [vmem:[%s2 + $0x8] sm:$0xf]
        %468 = vset.pattern.permute.xlu0 0
        %469 = vperm.xlu0 %468, %v465
        %v470 = vpop.permute.xlu0 %469
        %473 = vset.pattern.permute.xlu0 0
        %474 = vperm.xlu0 %473, %v466
        %v475 = vpop.permute.xlu0 %474
        %v477 = vadd.f32 %v463, %v470
        %v478 = vadd.f32 %v464, %v475
        %479 = vrot.lane.b32.xlu0 %v348, 127
        %v480 = vpop.permute.xlu0 %479
        %v481 = vrot.slane %v480, 4
        %vm482 = vcmask 1039360
        %v483 = vsel %vm482, %v481, %v480
        %v485 = vmax.f32 %v258, %v483
        %v487 = vmax.f32 %v348, %v480
        %488 = vrot.lane.b32.xlu0 %v348, 126
        %v489 = vpop.permute.xlu0 %488
        %v490 = vrot.slane %v489, 4
        %vm491 = vcmask 1031168
        %v492 = vsel %vm491, %v490, %v489
        %v494 = vmax.f32 %v485, %v492
        %v495 = vlaneseq
        %v496 = vand.u32 %v495, 127
        %vm497 = vcmp.eq.s32.totalorder %v496, 0
        %s498 = scalar_select %p245, 1, 0
        %v499 = vstv %s498
        %vm500 = vcmp.eq.s32.totalorder %v499, 1
        %vm501 = vmand %vm500, %vm497
        %503 = vst [vmem:[#allocation1] ss:$2 sm:$0xff] %v494
        %v504 = vld.sshfl [vmem:[#allocation1] sm:$0xff pattern:$0x75316420]
        %v505 = vld.sshfl [vmem:[#allocation1 + $0x8] sm:$0xff pattern:$0x75316420]
        %506 = vrot.lane.b32.xlu0 %v504, 1
        %v507 = vpop.permute.xlu0 %506
        %508 = vrot.lane.b32.xlu0 %v505, 1
        %v509 = vpop.permute.xlu0 %508
        %v510 = vsel %vm270, %v507, %v509
        %v512 = vsel %vm501, %v487, %v510
        %vm513 = vcmp.eq.s32.totalorder %v496, 15
        %vm514 = vmand %vm500, %vm513
        %516 = vst [vmem:[#allocation1] ss:$2 sm:$0xff] %v485
        %v517 = vld.sshfl [vmem:[#allocation1] sm:$0xff pattern:$0x75316420]
        %v518 = vld.sshfl [vmem:[#allocation1 + $0x8] sm:$0xff pattern:$0x75316420]
        %519 = vrot.lane.b32.xlu0 %v517, 1
        %v520 = vpop.permute.xlu0 %519
        %521 = vrot.lane.b32.xlu0 %v518, 1
        %v522 = vpop.permute.xlu0 %521
        %v523 = vsel %vm270, %v520, %v522
        %v525 = vsel %vm514, %v523, %v512
        %v526 = vld [vmem:[%s3] sm:$0xf]
        %v527 = vld [vmem:[%s4] sm:$0xf]
        %529 = vset.pattern.permute.xlu0 0
        %530 = vperm.xlu0 %529, %v527
        %v531 = vpop.permute.xlu0 %530
        %v534 = vsel %vm272, %v526, 0
        %v537 = vsel %vm279, %v525, 0
        %539 = vmatpush.msra.mxu0 0.0
        %540 = vmatpush.msra.mxu0 0.0
        %541 = vmatpush.msra.mxu0 0.0
        %542 = vmatpush.msra.mxu0 0.0
        %543 = vmatpush.msra.mxu0 0.0
        %544 = vmatpush.msra.mxu0 0.0
        %545 = vmatpush.msra.mxu0 0.0
        %546 = vmatpush.msra.mxu0 0.0
        %547 = vmatpush.msra.mxu0 0.0
        %548 = vmatpush.msra.mxu0 0.0
        %549 = vmatpush.msra.mxu0 0.0
        %550 = vmatpush.msra.mxu0 0.0
        %551 = vmatpush.msra.mxu0 0.0
        %552 = vmatpush.msra.mxu0 0.0
        %553 = vmatpush.msra.mxu0 0.0
        %554 = vmatpush.msra.mxu0 %v537
        %555 = vmatmul.f32.gmra.mxu0 %v534
        %v556 = vpop.f32.mrf.mxu0
        %v557 = vadd.f32 %v531, %v556
        %558 = vdwg.mxu0
        %v560 = vrot.slane %v557, 4
        %v562 = vsel %vm279, %v478, %v560
        %v563 = vmax.f32 %v477, 0.0
        %v564 = vmax.f32 %v562, 0.0
        %vm565 = vcmask 130048
        %566 = vst.msk [vmem:[%s237] sm:$0xff] %vm565, %v563
        %567 = vst.msk [vmem:[%s237 + $0x8] sm:$0xff] %vm565, %v564
        %s568 = sand.u32 %s153, 1
        %s569 = scalar_lea.sflag [#allocation4], %s568
        %s570 = sand.u32 %s153, 1
        %s571 = smul.addr %s570, 16
        %s572 = scalar_lea.vmem [#allocation3], %s571
        // Predicated region
        $region45: #{tpu_custom_call.1} parent=39 // pred_check
          %p573 = pneg %p163
        $region46: #{tpu_custom_call.1} parent=39 // pred_check_branch
          %575 = sbr.rel (%p573) target = $region48
        $region47: #{tpu_custom_call.1} parent=39 // pred_region
          %577 = vsyncadd %s569, 0
          %s578 = smul.addr %s23, 2
          %s579 = sadd.s32 %s24, %s578
          %s580 = smul.addr %s579, 8
          %s581 = scalar_lea.hbm %s5, %s580
          %s582 = sshll.u32 %s572, 4
          %s583 = int_to_ptr.vmem [resolvable:$true] %s582
          %s584 = sshll.u32 %s581, 4
          %s585 = int_to_ptr.hbm [resolvable:$true] %s584
          %590 = dma.vmem_to_hbm [thread:$0]  %s583, 256, %s585, %s569, 128, 128, 8
        $region48: #{tpu_custom_call.1} parent=39 // pred_fallthru
          _
      $region40: #{tpu_custom_call.1} parent=5 // pred_fallthru
        _
      %p591 = scmp.le.s32.totalorder 2, %s14
      // Predicated region
      $region49: #{tpu_custom_call.1} parent=5 // pred_check
        %p592 = pneg %p591
      $region50: #{tpu_custom_call.1} parent=5 // pred_check_branch
        %594 = sbr.rel (%p592) target = $region52
      $region51: #{tpu_custom_call.1} parent=5 // pred_region
        %s595 = ssub.s32 %s14, 2
        // Predicated region
        $region53: #{tpu_custom_call.1} parent=51 // pred_check
          %p596 = pneg %p169
        $region54: #{tpu_custom_call.1} parent=51 // pred_check_branch
          %598 = sbr.rel (%p596) target = $region56
        $region55: #{tpu_custom_call.1} parent=51 // pred_region
          %s599 = sand.u32 %s154, 1
          %s600 = scalar_lea.sflag [#allocation4], %s599
          %s601 = sand.u32 %s154, 1
          %s602 = smul.addr %s601, 16
          %s603 = scalar_lea.vmem [#allocation3], %s602
          %605 = dma.done %s600, 256
        $region56: #{tpu_custom_call.1} parent=51 // pred_fallthru
          _
      $region52: #{tpu_custom_call.1} parent=5 // pred_fallthru
        _
    $region6: #{tpu_custom_call.1} parent=1 // loop_footer
      %s18 = sadd.s32 1, %s14
    $region7: #{tpu_custom_call.1} parent=1 // loop_footer_branch
      %13 = sbr.rel target = $region3
    $region8: #{tpu_custom_call.1} parent=1 // loop_exit
      _
    %606 = vsyncpa [#allocation4], 1
    %s607 = scalar_lea.sflag [#allocation4], 1
    %608 = vsyncpa %s607, 1

</llo_original>
